<compile_context>
chip_gen: v7x
topology: tpu7x:2x2x1
jax: 0.10.0
libtpu: 0.0.40
codegen_flags: <defaults>
</compile_context>

<pallas_src>
import jax
import jax.numpy as jnp
from jax import lax
from jax.experimental import pallas as pl
from jax.experimental.pallas import tpu as pltpu


# ----------------------------------------------------------------------------
# Kernel
# ----------------------------------------------------------------------------
def double_conv_residual_kernel(
    x_ref,    # (TB, H, W*Cin)        input, lane-dense, MXU operand dtype
    w1_ref,   # (3, W*Cin,  W*Cmid)   banded conv1 weights (BN1 scale folded)
    b1_ref,   # (1, W*Cmid)           BN1 bias, tiled per lane (f32)
    w2_ref,   # (3, W*Cmid, W*Cout)   banded conv2 weights (BN2 scale folded)
    b2_ref,   # (1, W*Cout)           BN2 bias, tiled (f32)
    wr_ref,   # (W*Cin, W*Cout)       block-diag 1x1 residual (BNr scale folded)
    br_ref,   # (1, W*Cout)           BNr bias, tiled (f32)
    out_ref,  # (TB, H, W*Cout)       f32 output, lane-dense
):
    TB, H, WCin = x_ref.shape
    WCmid = w1_ref.shape[-1]
    WCout = w2_ref.shape[-1]
    mm_dtype = x_ref.dtype

    def conv3x3_banded(xd, wband_ref):
        """3x3 SAME conv on lane-dense (TB, H, W*C) activations.

        Horizontal taps + column padding are folded into the banded weight
        matrices; vertical taps are sublane shifts with explicit zero rows
        (never wrap across images).  Returns f32 (TB, H, n_out).
        """
        wc = xd.shape[-1]
        n_out = wband_ref.shape[-1]
        zero_row = jnp.zeros((TB, 1, wc), xd.dtype)
        xp = jnp.concatenate([zero_row, xd, zero_row], axis=1)   # (TB, H+2, wc)
        acc = jnp.zeros((TB * H, n_out), jnp.float32)
        for dy in range(3):                                       # static unroll
            acc = acc + jnp.dot(
                xp[:, dy:dy + H, :].reshape(TB * H, wc),
                wband_ref[dy],
                preferred_element_type=jnp.float32)
        return acc.reshape(TB, H, n_out)

    x = x_ref[...]                                                # (TB, H, WCin)

    # ---- conv1 (3x3, pad=1, no bias) -> BN1 (scale in weights) -> ReLU ------
    h1 = conv3x3_banded(x, w1_ref)                                # f32
    h1 = jnp.maximum(h1 + b1_ref[...].reshape(1, 1, WCmid), 0.0)
    # TODO(synk): Dropout2d(p=0.1) is identity in eval mode; training-mode
    # channel dropout would use pltpu.prng_seed + pltpu.prng_random_bits.

    # ---- conv2 (3x3, pad=1, no bias) -> BN2 -> ReLU --------------------------
    h2 = conv3x3_banded(h1.astype(mm_dtype), w2_ref)              # f32
    h2 = jnp.maximum(h2 + b2_ref[...].reshape(1, 1, WCout), 0.0)

    # ---- residual: 1x1 conv + BNr (block-diagonal weight keeps it dense) ----
    res = jnp.dot(x.reshape(TB * H, WCin), wr_ref[...],
                  preferred_element_type=jnp.float32).reshape(TB, H, WCout)
    res = res + br_ref[...].reshape(1, 1, WCout)

    out_ref[...] = (h2 + res).astype(out_ref.dtype)


# ----------------------------------------------------------------------------
# Wrapper-side weight preparation (block-banded / block-diagonal matrices)
# ----------------------------------------------------------------------------
def _band_3x3(w_hwio, Wd):
    """HWIO (3,3,Ci,Co) -> (3, Wd*Ci, Wd*Co) block-banded matrices.

    band[dy][wp*Ci + ci, w*Co + co] = w_hwio[dy, wp - w + 1, ci, co] when
    |wp - w| <= 1, zero otherwise -- i.e. the horizontal taps and the pad=1
    column padding of a stride-1 SAME conv folded into one matmul over the
    lane-dense W*Ci axis.
    """
    KH, KW, Ci, Co = w_hwio.shape
    bands = []
    for dy in range(KH):
        acc = jnp.zeros((Wd, Ci, Wd, Co), jnp.float32)
        for dx in range(KW):
            # shift[wp, w] = 1 iff wp == w + dx - 1 (in range)
            shift = jnp.eye(Wd, k=1 - dx, dtype=jnp.float32)
            acc = acc + jnp.einsum('pw,ic->piwc', shift,
                                   w_hwio[dy, dx].astype(jnp.float32))
        bands.append(acc.reshape(Wd * Ci, Wd * Co))
    return jnp.stack(bands, axis=0)


def _band_1x1(w_io, Wd):
    """(Ci, Co) 1x1 conv -> block-diagonal (Wd*Ci, Wd*Co)."""
    eye = jnp.eye(Wd, dtype=jnp.float32)
    Ci, Co = w_io.shape
    return jnp.einsum('pw,ic->piwc', eye,
                      w_io.astype(jnp.float32)).reshape(Wd * Ci, Wd * Co)


def double_conv_residual(x_nchw, params, *, matmul_dtype=jnp.float32,
                         images_per_step=8):
    """x_nchw: (N, Cin, H, W) f32 -> (N, Cout, H, W) f32.

    matmul_dtype: dtype of the MXU operands (input, mid activation, weights).
    bf16 halves DMA bytes and doubles MXU rate on v5e/v6e/v7x alike;
    accumulation and the bias/ReLU epilogue stay f32.
    """
    N, Cin, H, W = x_nchw.shape
    Cmid = params["w1"].shape[-1]
    Cout = params["w2"].shape[-1]

    # Batch tile: largest divisor of N that is <= images_per_step.
    TB = max(d for d in range(1, min(N, images_per_step) + 1) if N % d == 0)

    # NCHW -> lane-dense (N, H, W*Cin), cast once to the MXU operand dtype.
    x_dense = jnp.transpose(x_nchw, (0, 2, 3, 1)).reshape(
        N, H, W * Cin).astype(matmul_dtype)

    # Fold BN scales into the conv weights in f32 (exact for eval-mode BN),
    # build banded / block-diagonal matrices, then cast to the operand dtype.
    w1f = params["w1"] * params["bn1_scale"].reshape(1, 1, 1, Cmid)
    w2f = params["w2"] * params["bn2_scale"].reshape(1, 1, 1, Cout)
    wrf = params["wr"] * params["bnr_scale"].reshape(1, Cout)

    w1b = _band_3x3(w1f, W).astype(matmul_dtype)      # (3, W*Cin,  W*Cmid)
    w2b = _band_3x3(w2f, W).astype(matmul_dtype)      # (3, W*Cmid, W*Cout)
    wrb = _band_1x1(wrf, W).astype(matmul_dtype)      # (W*Cin, W*Cout)

    # Biases tiled to the lane-dense layout: b_tiled[w*C + c] = bias[c].
    b1 = jnp.tile(params["bn1_bias"].reshape(Cmid), W).reshape(1, W * Cmid)
    b2 = jnp.tile(params["bn2_bias"].reshape(Cout), W).reshape(1, W * Cout)
    br = jnp.tile(params["bnr_bias"].reshape(Cout), W).reshape(1, W * Cout)

    def bcast(shape):
        zeros = (0,) * len(shape)
        return pl.BlockSpec(shape, lambda b, _z=zeros: _z)

    out = pl.pallas_call(
        double_conv_residual_kernel,
        out_shape=jax.ShapeDtypeStruct((N, H, W * Cout), jnp.float32),
        grid=(N // TB,),
        in_specs=[
            pl.BlockSpec((TB, H, W * Cin), lambda b: (b, 0, 0)),
            bcast((3, W * Cin, W * Cmid)),
            bcast((1, W * Cmid)),
            bcast((3, W * Cmid, W * Cout)),
            bcast((1, W * Cout)),
            bcast((W * Cin, W * Cout)),
            bcast((1, W * Cout)),
        ],
        out_specs=pl.BlockSpec((TB, H, W * Cout), lambda b: (b, 0, 0)),
        compiler_params=pltpu.CompilerParams(
            dimension_semantics=("parallel",)),
    )(x_dense, w1b, b1, w2b, b2, wrb, br)

    return jnp.transpose(out.reshape(N, H, W, Cout), (0, 3, 1, 2))   # NCHW


# ----------------------------------------------------------------------------
# Deterministic params + plain-JAX reference
# ----------------------------------------------------------------------------
def make_params(key, in_channels, out_channels, mid_channels=None):
    if not mid_channels:
        mid_channels = out_channels
    k1, k2, k3 = jax.random.split(key, 3)

    def bn_affine(c, salt):
        # Deterministic eval-mode BN: fold gamma/beta/mean/var into scale/bias.
        gamma = 1.0 + 0.05 * jnp.arange(c, dtype=jnp.float32)
        beta = 0.01 * jnp.arange(c, dtype=jnp.float32)
        mean = 0.02 * salt * jnp.arange(c, dtype=jnp.float32)
        var = 1.0 + 0.1 * jnp.arange(c, dtype=jnp.float32)
        scale = gamma / jnp.sqrt(var + 1e-5)
        bias = beta - mean * scale
        return scale.reshape(1, c), bias.reshape(1, c)

    bn1s, bn1b = bn_affine(mid_channels, 1.0)
    bn2s, bn2b = bn_affine(out_channels, 2.0)
    bnrs, bnrb = bn_affine(out_channels, 3.0)
    return {
        "w1": 0.2 * jax.random.normal(k1, (3, 3, in_channels, mid_channels), jnp.float32),
        "w2": 0.2 * jax.random.normal(k2, (3, 3, mid_channels, out_channels), jnp.float32),
        "wr": 0.2 * jax.random.normal(k3, (in_channels, out_channels), jnp.float32),
        "bn1_scale": bn1s, "bn1_bias": bn1b,
        "bn2_scale": bn2s, "bn2_bias": bn2b,
        "bnr_scale": bnrs, "bnr_bias": bnrb,
    }


def ref_forward(x_nchw, p, matmul_dtype=jnp.float32):
    """Plain-JAX reference with eval-mode PyTorch semantics.

    The BN scale is folded into the conv weights in f32 (mathematically
    identical to BN-after-conv in eval mode); conv operands are cast to
    matmul_dtype and accumulation / bias / ReLU stay f32 -- mirroring the
    kernel's computation so both f32 and bf16 checks are tight.
    """
    Cin = x_nchw.shape[1]
    Cmid = p["w1"].shape[-1]
    Cout = p["w2"].shape[-1]
    x = jnp.transpose(x_nchw, (0, 2, 3, 1)).astype(jnp.float32)
    dn = ("NHWC", "HWIO", "NHWC")

    def conv(inp, w):
        return lax.conv_general_dilated(
            inp.astype(matmul_dtype), w.astype(matmul_dtype), (1, 1), "SAME",
            dimension_numbers=dn, preferred_element_type=jnp.float32)

    w1f = p["w1"] * p["bn1_scale"].reshape(1, 1, 1, Cmid)
    w2f = p["w2"] * p["bn2_scale"].reshape(1, 1, 1, Cout)
    wrf = (p["wr"] * p["bnr_scale"].reshape(1, Cout)).reshape(1, 1, Cin, Cout)

    h = jnp.maximum(conv(x, w1f) + p["bn1_bias"][0], 0.0)
    h = jnp.maximum(conv(h, w2f) + p["bn2_bias"][0], 0.0)
    r = conv(x, wrf) + p["bnr_bias"][0]
    return jnp.transpose(h + r, (0, 3, 1, 2))


if __name__ == "__main__":
    N, Cin, Cout, H, W = 2, 4, 8, 16, 16
    key = jax.random.PRNGKey(0)
    kx, kp = jax.random.split(key)
    x = jax.random.normal(kx, (N, Cin, H, W), jnp.float32)
    params = make_params(kp, Cin, Cout)
    y_ref = ref_forward(x, params)

    # f32 MXU operands, whole batch in one grid step.
    y = jax.block_until_ready(double_conv_residual(x, params))
    assert y.shape == (N, Cout, H, W)
    assert jnp.allclose(y, y_ref, rtol=5e-4, atol=5e-4), (
        float(jnp.max(jnp.abs(y - y_ref))))

    # Same kernel with one image per grid step (exercises the batch-block
    # index_map / multi-step pipeline path).
    y1 = jax.block_until_ready(
        double_conv_residual(x, params, images_per_step=1))
    assert jnp.allclose(y1, y_ref, rtol=5e-4, atol=5e-4), (
        float(jnp.max(jnp.abs(y1 - y_ref))))

    # bf16 MXU operands (fast path on v5e/v6e/v7x): compare against a
    # reference using the same operand dtype and f32 accumulation.
    y_bf = jax.block_until_ready(
        double_conv_residual(x, params, matmul_dtype=jnp.bfloat16))
    y_ref_bf = ref_forward(x, params, matmul_dtype=jnp.bfloat16)
    assert jnp.allclose(y_bf, y_ref_bf, rtol=2e-2, atol=2e-2), (
        float(jnp.max(jnp.abs(y_bf - y_ref_bf))))

    print("KERNEL_OK")
</pallas_src>

<mosaic_0001>
module attributes {stable_mosaic.version = 11 : i64} {
  func.func @double_conv_residual_kernel(%arg0: i32, %arg1: memref<2x16x64xf32, #tpu.memory_space<vmem>>, %arg2: memref<3x64x128xf32, #tpu.memory_space<vmem>>, %arg3: memref<1x128xf32, #tpu.memory_space<vmem>>, %arg4: memref<3x128x128xf32, #tpu.memory_space<vmem>>, %arg5: memref<1x128xf32, #tpu.memory_space<vmem>>, %arg6: memref<64x128xf32, #tpu.memory_space<vmem>>, %arg7: memref<1x128xf32, #tpu.memory_space<vmem>>, %arg8: memref<2x16x128xf32, #tpu.memory_space<vmem>>) attributes {dimension_semantics = [#tpu.dimension_semantics<parallel>], iteration_bounds = array<i64: 1>, scalar_prefetch = 0 : i64, scratch_operands = 0 : i64, tpu.core_type = #tpu.core_type<tc>, window_params = [{transform_indices = @transform_0, window_bounds = array<i64: 2, 16, 64>}, {pipeline_mode = #tpu.pipeline_mode<synchronous>, transform_indices = @transform_1, window_bounds = array<i64: 3, 64, 128>}, {pipeline_mode = #tpu.pipeline_mode<synchronous>, transform_indices = @transform_2, window_bounds = array<i64: 1, 128>}, {pipeline_mode = #tpu.pipeline_mode<synchronous>, transform_indices = @transform_3, window_bounds = array<i64: 3, 128, 128>}, {pipeline_mode = #tpu.pipeline_mode<synchronous>, transform_indices = @transform_4, window_bounds = array<i64: 1, 128>}, {pipeline_mode = #tpu.pipeline_mode<synchronous>, transform_indices = @transform_5, window_bounds = array<i64: 64, 128>}, {pipeline_mode = #tpu.pipeline_mode<synchronous>, transform_indices = @transform_6, window_bounds = array<i64: 1, 128>}, {transform_indices = @transform_7, window_bounds = array<i64: 2, 16, 128>}]} {
    %c0 = arith.constant 0 : index
    %c0_0 = arith.constant 0 : index
    %c0_1 = arith.constant 0 : index
    %0 = vector.load %arg1[%c0, %c0_0, %c0_1] : memref<2x16x64xf32, #tpu.memory_space<vmem>>, vector<2x16x64xf32>
    %cst = arith.constant 0.000000e+00 : f32
    %1 = vector.broadcast %cst : f32 to vector<2x1x64xf32>
    %2 = tpu.concatenate %1, %0, %1 in 1 : vector<2x1x64xf32>, vector<2x16x64xf32>, vector<2x1x64xf32> -> vector<2x18x64xf32>
    %cst_2 = arith.constant 0.000000e+00 : f32
    %3 = vector.broadcast %cst_2 : f32 to vector<32x128xf32>
    %4 = vector.extract_strided_slice %2 {offsets = [0, 0, 0], sizes = [2, 16, 64], strides = [1, 1, 1]} : vector<2x18x64xf32> to vector<2x16x64xf32>
    %5 = vector.shape_cast %4 : vector<2x16x64xf32> to vector<32x64xf32>
    %c0_3 = arith.constant 0 : index
    %c0_4 = arith.constant 0 : index
    %c0_5 = arith.constant 0 : index
    %6 = vector.load %arg2[%c0_3, %c0_4, %c0_5] : memref<3x64x128xf32, #tpu.memory_space<vmem>>, vector<1x64x128xf32>
    %7 = vector.shape_cast %6 : vector<1x64x128xf32> to vector<64x128xf32>
    %cst_6 = arith.constant dense<0.000000e+00> : vector<32x128xf32>
    %8 = tpu.matmul %5, %7, %cst_6 {dimension_numbers = #tpu.dot_dimension_numbers<[1], [0], [0], [1], [0, 0, 1, 1], [], []>} : vector<32x64xf32>, vector<64x128xf32>, vector<32x128xf32> -> vector<32x128xf32>
    %9 = arith.addf %3, %8 : vector<32x128xf32>
    %10 = vector.extract_strided_slice %2 {offsets = [0, 1, 0], sizes = [2, 16, 64], strides = [1, 1, 1]} : vector<2x18x64xf32> to vector<2x16x64xf32>
    %11 = vector.shape_cast %10 : vector<2x16x64xf32> to vector<32x64xf32>
    %c1 = arith.constant 1 : index
    %c0_7 = arith.constant 0 : index
    %c0_8 = arith.constant 0 : index
    %12 = vector.load %arg2[%c1, %c0_7, %c0_8] : memref<3x64x128xf32, #tpu.memory_space<vmem>>, vector<1x64x128xf32>
    %13 = vector.shape_cast %12 : vector<1x64x128xf32> to vector<64x128xf32>
    %cst_9 = arith.constant dense<0.000000e+00> : vector<32x128xf32>
    %14 = tpu.matmul %11, %13, %cst_9 {dimension_numbers = #tpu.dot_dimension_numbers<[1], [0], [0], [1], [0, 0, 1, 1], [], []>} : vector<32x64xf32>, vector<64x128xf32>, vector<32x128xf32> -> vector<32x128xf32>
    %15 = arith.addf %9, %14 : vector<32x128xf32>
    %16 = vector.extract_strided_slice %2 {offsets = [0, 2, 0], sizes = [2, 16, 64], strides = [1, 1, 1]} : vector<2x18x64xf32> to vector<2x16x64xf32>
    %17 = vector.shape_cast %16 : vector<2x16x64xf32> to vector<32x64xf32>
    %c2 = arith.constant 2 : index
    %c0_10 = arith.constant 0 : index
    %c0_11 = arith.constant 0 : index
    %18 = vector.load %arg2[%c2, %c0_10, %c0_11] : memref<3x64x128xf32, #tpu.memory_space<vmem>>, vector<1x64x128xf32>
    %19 = vector.shape_cast %18 : vector<1x64x128xf32> to vector<64x128xf32>
    %cst_12 = arith.constant dense<0.000000e+00> : vector<32x128xf32>
    %20 = tpu.matmul %17, %19, %cst_12 {dimension_numbers = #tpu.dot_dimension_numbers<[1], [0], [0], [1], [0, 0, 1, 1], [], []>} : vector<32x64xf32>, vector<64x128xf32>, vector<32x128xf32> -> vector<32x128xf32>
    %21 = arith.addf %15, %20 : vector<32x128xf32>
    %22 = vector.shape_cast %21 : vector<32x128xf32> to vector<2x16x128xf32>
    %c0_13 = arith.constant 0 : index
    %c0_14 = arith.constant 0 : index
    %23 = vector.load %arg3[%c0_13, %c0_14] : memref<1x128xf32, #tpu.memory_space<vmem>>, vector<1x128xf32>
    %24 = vector.shape_cast %23 : vector<1x128xf32> to vector<1x1x128xf32>
    %25 = vector.broadcast %24 : vector<1x1x128xf32> to vector<2x16x128xf32>
    %26 = arith.addf %22, %25 : vector<2x16x128xf32>
    %cst_15 = arith.constant 0.000000e+00 : f32
    %27 = vector.broadcast %cst_15 : f32 to vector<2x16x128xf32>
    %28 = arith.maximumf %26, %27 : vector<2x16x128xf32>
    %cst_16 = arith.constant 0.000000e+00 : f32
    %29 = vector.broadcast %cst_16 : f32 to vector<2x1x128xf32>
    %30 = tpu.concatenate %29, %28, %29 in 1 : vector<2x1x128xf32>, vector<2x16x128xf32>, vector<2x1x128xf32> -> vector<2x18x128xf32>
    %cst_17 = arith.constant 0.000000e+00 : f32
    %31 = vector.broadcast %cst_17 : f32 to vector<32x128xf32>
    %32 = vector.extract_strided_slice %30 {offsets = [0, 0, 0], sizes = [2, 16, 128], strides = [1, 1, 1]} : vector<2x18x128xf32> to vector<2x16x128xf32>
    %33 = vector.shape_cast %32 : vector<2x16x128xf32> to vector<32x128xf32>
    %c0_18 = arith.constant 0 : index
    %c0_19 = arith.constant 0 : index
    %c0_20 = arith.constant 0 : index
    %34 = vector.load %arg4[%c0_18, %c0_19, %c0_20] : memref<3x128x128xf32, #tpu.memory_space<vmem>>, vector<1x128x128xf32>
    %35 = vector.shape_cast %34 : vector<1x128x128xf32> to vector<128x128xf32>
    %cst_21 = arith.constant dense<0.000000e+00> : vector<32x128xf32>
    %36 = tpu.matmul %33, %35, %cst_21 {dimension_numbers = #tpu.dot_dimension_numbers<[1], [0], [0], [1], [0, 0, 1, 1], [], []>} : vector<32x128xf32>, vector<128x128xf32>, vector<32x128xf32> -> vector<32x128xf32>
    %37 = arith.addf %31, %36 : vector<32x128xf32>
    %38 = vector.extract_strided_slice %30 {offsets = [0, 1, 0], sizes = [2, 16, 128], strides = [1, 1, 1]} : vector<2x18x128xf32> to vector<2x16x128xf32>
    %39 = vector.shape_cast %38 : vector<2x16x128xf32> to vector<32x128xf32>
    %c1_22 = arith.constant 1 : index
    %c0_23 = arith.constant 0 : index
    %c0_24 = arith.constant 0 : index
    %40 = vector.load %arg4[%c1_22, %c0_23, %c0_24] : memref<3x128x128xf32, #tpu.memory_space<vmem>>, vector<1x128x128xf32>
    %41 = vector.shape_cast %40 : vector<1x128x128xf32> to vector<128x128xf32>
    %cst_25 = arith.constant dense<0.000000e+00> : vector<32x128xf32>
    %42 = tpu.matmul %39, %41, %cst_25 {dimension_numbers = #tpu.dot_dimension_numbers<[1], [0], [0], [1], [0, 0, 1, 1], [], []>} : vector<32x128xf32>, vector<128x128xf32>, vector<32x128xf32> -> vector<32x128xf32>
    %43 = arith.addf %37, %42 : vector<32x128xf32>
    %44 = vector.extract_strided_slice %30 {offsets = [0, 2, 0], sizes = [2, 16, 128], strides = [1, 1, 1]} : vector<2x18x128xf32> to vector<2x16x128xf32>
    %45 = vector.shape_cast %44 : vector<2x16x128xf32> to vector<32x128xf32>
    %c2_26 = arith.constant 2 : index
    %c0_27 = arith.constant 0 : index
    %c0_28 = arith.constant 0 : index
    %46 = vector.load %arg4[%c2_26, %c0_27, %c0_28] : memref<3x128x128xf32, #tpu.memory_space<vmem>>, vector<1x128x128xf32>
    %47 = vector.shape_cast %46 : vector<1x128x128xf32> to vector<128x128xf32>
    %cst_29 = arith.constant dense<0.000000e+00> : vector<32x128xf32>
    %48 = tpu.matmul %45, %47, %cst_29 {dimension_numbers = #tpu.dot_dimension_numbers<[1], [0], [0], [1], [0, 0, 1, 1], [], []>} : vector<32x128xf32>, vector<128x128xf32>, vector<32x128xf32> -> vector<32x128xf32>
    %49 = arith.addf %43, %48 : vector<32x128xf32>
    %50 = vector.shape_cast %49 : vector<32x128xf32> to vector<2x16x128xf32>
    %c0_30 = arith.constant 0 : index
    %c0_31 = arith.constant 0 : index
    %51 = vector.load %arg5[%c0_30, %c0_31] : memref<1x128xf32, #tpu.memory_space<vmem>>, vector<1x128xf32>
    %52 = vector.shape_cast %51 : vector<1x128xf32> to vector<1x1x128xf32>
    %53 = vector.broadcast %52 : vector<1x1x128xf32> to vector<2x16x128xf32>
    %54 = arith.addf %50, %53 : vector<2x16x128xf32>
    %cst_32 = arith.constant 0.000000e+00 : f32
    %55 = vector.broadcast %cst_32 : f32 to vector<2x16x128xf32>
    %56 = arith.maximumf %54, %55 : vector<2x16x128xf32>
    %57 = vector.shape_cast %0 : vector<2x16x64xf32> to vector<32x64xf32>
    %c0_33 = arith.constant 0 : index
    %c0_34 = arith.constant 0 : index
    %58 = vector.load %arg6[%c0_33, %c0_34] : memref<64x128xf32, #tpu.memory_space<vmem>>, vector<64x128xf32>
    %cst_35 = arith.constant dense<0.000000e+00> : vector<32x128xf32>
    %59 = tpu.matmul %57, %58, %cst_35 {dimension_numbers = #tpu.dot_dimension_numbers<[1], [0], [0], [1], [0, 0, 1, 1], [], []>} : vector<32x64xf32>, vector<64x128xf32>, vector<32x128xf32> -> vector<32x128xf32>
    %60 = vector.shape_cast %59 : vector<32x128xf32> to vector<2x16x128xf32>
    %c0_36 = arith.constant 0 : index
    %c0_37 = arith.constant 0 : index
    %61 = vector.load %arg7[%c0_36, %c0_37] : memref<1x128xf32, #tpu.memory_space<vmem>>, vector<1x128xf32>
    %62 = vector.shape_cast %61 : vector<1x128xf32> to vector<1x1x128xf32>
    %63 = vector.broadcast %62 : vector<1x1x128xf32> to vector<2x16x128xf32>
    %64 = arith.addf %60, %63 : vector<2x16x128xf32>
    %65 = arith.addf %56, %64 : vector<2x16x128xf32>
    %c0_38 = arith.constant 0 : index
    %c0_39 = arith.constant 0 : index
    %c0_40 = arith.constant 0 : index
    %66 = vector.load %arg8[%c0_38, %c0_39, %c0_40] : memref<2x16x128xf32, #tpu.memory_space<vmem>>, vector<2x16x128xf32>
    tpu.vector_store %arg8[%c0_38, %c0_39, %c0_40], %65 {strides = array<i32>} : memref<2x16x128xf32, #tpu.memory_space<vmem>>, vector<2x16x128xf32>,
    return
  }
  func.func @transform_0(%arg0: i32) -> (i32, i32, i32) {
    %c0_i32 = arith.constant 0 : i32
    %c0_i32_0 = arith.constant 0 : i32
    %c0_i32_1 = arith.constant 0 : i32
    return %arg0, %c0_i32, %c0_i32_0 : i32, i32, i32
  }
  func.func @transform_1(%arg0: i32) -> (i32, i32, i32) {
    %c0_i32 = arith.constant 0 : i32
    %c0_i32_0 = arith.constant 0 : i32
    %c0_i32_1 = arith.constant 0 : i32
    %c0_i32_2 = arith.constant 0 : i32
    return %c0_i32, %c0_i32_0, %c0_i32_1 : i32, i32, i32
  }
  func.func @transform_2(%arg0: i32) -> (i32, i32) {
    %c0_i32 = arith.constant 0 : i32
    %c0_i32_0 = arith.constant 0 : i32
    %c0_i32_1 = arith.constant 0 : i32
    return %c0_i32, %c0_i32_0 : i32, i32
  }
  func.func @transform_3(%arg0: i32) -> (i32, i32, i32) {
    %c0_i32 = arith.constant 0 : i32
    %c0_i32_0 = arith.constant 0 : i32
    %c0_i32_1 = arith.constant 0 : i32
    %c0_i32_2 = arith.constant 0 : i32
    return %c0_i32, %c0_i32_0, %c0_i32_1 : i32, i32, i32
  }
  func.func @transform_4(%arg0: i32) -> (i32, i32) {
    %c0_i32 = arith.constant 0 : i32
    %c0_i32_0 = arith.constant 0 : i32
    %c0_i32_1 = arith.constant 0 : i32
    return %c0_i32, %c0_i32_0 : i32, i32
  }
  func.func @transform_5(%arg0: i32) -> (i32, i32) {
    %c0_i32 = arith.constant 0 : i32
    %c0_i32_0 = arith.constant 0 : i32
    %c0_i32_1 = arith.constant 0 : i32
    return %c0_i32, %c0_i32_0 : i32, i32
  }
  func.func @transform_6(%arg0: i32) -> (i32, i32) {
    %c0_i32 = arith.constant 0 : i32
    %c0_i32_0 = arith.constant 0 : i32
    %c0_i32_1 = arith.constant 0 : i32
    return %c0_i32, %c0_i32_0 : i32, i32
  }
  func.func @transform_7(%arg0: i32) -> (i32, i32, i32) {
    %c0_i32 = arith.constant 0 : i32
    %c0_i32_0 = arith.constant 0 : i32
    %c0_i32_1 = arith.constant 0 : i32
    return %arg0, %c0_i32, %c0_i32_0 : i32, i32, i32
  }
}

</mosaic_0001>

<llo_original>
// kernel: tpu_custom_call.1
$region0: #{tpu_custom_call.1}
  #allocation0 [shape = 'u32[]', space=smem, size = 0x4, offset = 0x4, fixed_abs, tag = 'smem constant byte address 0x4 - core index']
  #allocation1 [shape = 'u32[144,128]{1,0:T(1,128)}', space=vmem, size = 0x12000, scoped, tag = 'internal scratch']
  %s0 = inlined_call_operand.hbm [shape: f32[2,16,64], index: 0, kind: input, shape index: {}]
  %s1 = inlined_call_operand.hbm [shape: f32[3,64,128], index: 1, kind: input, shape index: {}]
  %s2 = inlined_call_operand.vmem [shape: f32[1,128], index: 2, kind: input, shape index: {}]
  %s3 = inlined_call_operand.hbm [shape: f32[3,128,128], index: 3, kind: input, shape index: {}]
  %s4 = inlined_call_operand.vmem [shape: f32[1,128], index: 4, kind: input, shape index: {}]
  %s5 = inlined_call_operand.hbm [shape: f32[64,128], index: 5, kind: input, shape index: {}]
  %s6 = inlined_call_operand.vmem [shape: f32[1,128], index: 6, kind: input, shape index: {}]
  %s7 = inlined_call_operand.hbm [shape: f32[2,16,128], index: 7, kind: output, shape index: {}]
  %s8 = sld [smem:[#allocation0]]
  $region54: #{tpu_custom_call.1} parent=0
    _
  %s10 = ssub.s32 1, %s8
  %s11 = scalar_select 0, %s10, %s8
  $region1: #{tpu_custom_call.1} parent=0
    #allocation2 [shape = 'u8[16384]{0}', space=vmem, size = 0x4000, scoped, tag = 'input window, operand 0, single buffered']
    #allocation3 [shape = 's32[1]{0}', space=sflag, size = 0x4, scoped, tag = 'scoped memory for tpu_custom_call.1']
    #allocation4 [shape = 's32[1]{0}', space=sflag, size = 0x4, scoped, tag = 'scoped memory for tpu_custom_call.1']
    #allocation5 [shape = 'u8[98304]{0}', space=vmem, size = 0x18000, scoped, tag = 'input window, operand 1, single buffered']
    #allocation6 [shape = 's32[1]{0}', space=sflag, size = 0x4, scoped, tag = 'scoped memory for tpu_custom_call.1']
    #allocation7 [shape = 'u8[196608]{0}', space=vmem, size = 0x30000, scoped, tag = 'input window, operand 3, single buffered']
    #allocation8 [shape = 'u8[32768]{0}', space=vmem, size = 0x8000, scoped, tag = 'input window, operand 5, single buffered']
    #allocation9 [shape = 's32[1]{0}', space=sflag, size = 0x4, scoped, tag = 'scoped memory for tpu_custom_call.1']
    #allocation10 [shape = 'u8[16384]{0}', space=vmem, size = 0x4000, scoped, tag = 'output window, operand 0, single buffered']
    %12 = vsyncpa [#allocation3], 0
    %13 = vsyncpa [#allocation6], 0
    %14 = vsyncpa [#allocation9], 0
    %15 = vsyncpa [#allocation4], 0
    // Predicated region
    $region2: #{tpu_custom_call.1} parent=1 // pred_check
      _
    $region3: #{tpu_custom_call.1} parent=1 // pred_check_branch
      %17 = sbr.rel (0) target = $region5
    $region4: #{tpu_custom_call.1} parent=1 // pred_region
      %s19 = ssub.s32 512, 512
      %20 = vsyncadd [#allocation3], %s19
      %s21 = sshll.u32 [#allocation2], 4
      %s22 = int_to_ptr.vmem [resolvable:$true] %s21
      %27 = dma.hbm_to_vmem [thread:$0]  %s0, 512, %s22, [#allocation3], 128, 128, 8
    $region5: #{tpu_custom_call.1} parent=1 // pred_fallthru
      _
    // Predicated region
    $region6: #{tpu_custom_call.1} parent=1 // pred_check
      _
    $region7: #{tpu_custom_call.1} parent=1 // pred_check_branch
      %29 = sbr.rel (0) target = $region9
    $region8: #{tpu_custom_call.1} parent=1 // pred_region
      %s31 = ssub.s32 3072, 3072
      %32 = vsyncadd [#allocation6], %s31
      %s33 = sshll.u32 [#allocation5], 4
      %s34 = int_to_ptr.vmem [resolvable:$true] %s33
      %39 = dma.hbm_to_vmem [thread:$0]  %s1, 3072, %s34, [#allocation6], 128, 128, 8
    $region9: #{tpu_custom_call.1} parent=1 // pred_fallthru
      _
    // Predicated region
    $region10: #{tpu_custom_call.1} parent=1 // pred_check
      _
    $region11: #{tpu_custom_call.1} parent=1 // pred_check_branch
      %41 = sbr.rel (0) target = $region13
    $region12: #{tpu_custom_call.1} parent=1 // pred_region
      _
    $region13: #{tpu_custom_call.1} parent=1 // pred_fallthru
      _
    // Predicated region
    $region14: #{tpu_custom_call.1} parent=1 // pred_check
      _
    $region15: #{tpu_custom_call.1} parent=1 // pred_check_branch
      %43 = sbr.rel (0) target = $region17
    $region16: #{tpu_custom_call.1} parent=1 // pred_region
      %s45 = ssub.s32 6144, 6144
      %46 = vsyncadd [#allocation6], %s45
      %s47 = sshll.u32 [#allocation7], 4
      %s48 = int_to_ptr.vmem [resolvable:$true] %s47
      %53 = dma.hbm_to_vmem [thread:$0]  %s3, 6144, %s48, [#allocation6], 128, 128, 8
    $region17: #{tpu_custom_call.1} parent=1 // pred_fallthru
      _
    // Predicated region
    $region18: #{tpu_custom_call.1} parent=1 // pred_check
      _
    $region19: #{tpu_custom_call.1} parent=1 // pred_check_branch
      %55 = sbr.rel (0) target = $region21
    $region20: #{tpu_custom_call.1} parent=1 // pred_region
      _
    $region21: #{tpu_custom_call.1} parent=1 // pred_fallthru
      _
    // Predicated region
    $region22: #{tpu_custom_call.1} parent=1 // pred_check
      _
    $region23: #{tpu_custom_call.1} parent=1 // pred_check_branch
      %57 = sbr.rel (0) target = $region25
    $region24: #{tpu_custom_call.1} parent=1 // pred_region
      %s59 = ssub.s32 1024, 1024
      %60 = vsyncadd [#allocation9], %s59
      %s61 = sshll.u32 [#allocation8], 4
      %s62 = int_to_ptr.vmem [resolvable:$true] %s61
      %67 = dma.hbm_to_vmem [thread:$0]  %s5, 1024, %s62, [#allocation9], 128, 128, 8
    $region25: #{tpu_custom_call.1} parent=1 // pred_fallthru
      _
    // Predicated region
    $region26: #{tpu_custom_call.1} parent=1 // pred_check
      _
    $region27: #{tpu_custom_call.1} parent=1 // pred_check_branch
      %69 = sbr.rel (0) target = $region29
    $region28: #{tpu_custom_call.1} parent=1 // pred_region
      _
    $region29: #{tpu_custom_call.1} parent=1 // pred_fallthru
      _
    // Predicated region
    $region30: #{tpu_custom_call.1} parent=1 // pred_check
      _
    $region31: #{tpu_custom_call.1} parent=1 // pred_check_branch
      %71 = sbr.rel (0) target = $region33
    $region32: #{tpu_custom_call.1} parent=1 // pred_region
      %72 = dma.done [#allocation3], 512
    $region33: #{tpu_custom_call.1} parent=1 // pred_fallthru
      _
    // Predicated region
    $region34: #{tpu_custom_call.1} parent=1 // pred_check
      _
    $region35: #{tpu_custom_call.1} parent=1 // pred_check_branch
      %74 = sbr.rel (0) target = $region37
    $region36: #{tpu_custom_call.1} parent=1 // pred_region
      %75 = dma.done [#allocation6], 3072
    $region37: #{tpu_custom_call.1} parent=1 // pred_fallthru
      _
    // Predicated region
    $region38: #{tpu_custom_call.1} parent=1 // pred_check
      _
    $region39: #{tpu_custom_call.1} parent=1 // pred_check_branch
      %77 = sbr.rel (0) target = $region41
    $region40: #{tpu_custom_call.1} parent=1 // pred_region
      %78 = dma.done [#allocation6], 6144
    $region41: #{tpu_custom_call.1} parent=1 // pred_fallthru
      _
    // Predicated region
    $region42: #{tpu_custom_call.1} parent=1 // pred_check
      _
    $region43: #{tpu_custom_call.1} parent=1 // pred_check_branch
      %80 = sbr.rel (0) target = $region45
    $region44: #{tpu_custom_call.1} parent=1 // pred_region
      %81 = dma.done [#allocation9], 1024
    $region45: #{tpu_custom_call.1} parent=1 // pred_fallthru
      _
    %v82 = vld [vmem:[#allocation2] sm:$0xff]
    %v83 = vld [vmem:[#allocation2 + $0x8] sm:$0xff]
    %v84 = vld [vmem:[#allocation2 + $0x10] sm:$0xff]
    %v85 = vld [vmem:[#allocation2 + $0x18] sm:$0xff]
    %vm90 = vcmask 1040384
    %v91 = vrot.slane %v82, 7
    %v92 = vrot.slane %v83, 7
    %v93 = vsel %vm90, %v91, %v92
    %v94 = vrot.slane %v84, 7
    %v95 = vrot.slane %v85, 7
    %v96 = vsel %vm90, %v94, %v95
    %v101 = vsel %vm90, 0.0, %v91
    %v102 = vsel %vm90, 0.0, %v94
    %v103 = vsel %vm90, %v92, 0.0
    %v104 = vsel %vm90, %v95, 0.0
    %v105 = vld [vmem:[#allocation5] sm:$0xff]
    %v106 = vld [vmem:[#allocation5 + $0x8] sm:$0xff]
    %v107 = vld [vmem:[#allocation5 + $0x10] sm:$0xff]
    %v108 = vld [vmem:[#allocation5 + $0x18] sm:$0xff]
    %v109 = vld [vmem:[#allocation5 + $0x20] sm:$0xff]
    %v110 = vld [vmem:[#allocation5 + $0x28] sm:$0xff]
    %v111 = vld [vmem:[#allocation5 + $0x30] sm:$0xff]
    %v112 = vld [vmem:[#allocation5 + $0x38] sm:$0xff]
    %vm117 = vcmask 1046528
    %v118 = vrot.slane %v101, 1
    %v119 = vrot.slane %v93, 1
    %v120 = vsel %vm117, %v118, %v119
    %v121 = vrot.slane %v103, 1
    %v122 = vsel %vm117, %v119, %v121
    %v123 = vrot.slane %v102, 1
    %v124 = vrot.slane %v96, 1
    %v125 = vsel %vm117, %v123, %v124
    %v126 = vrot.slane %v104, 1
    %v127 = vsel %vm117, %v124, %v126
    %s128 = scalar_lea.vmem [#allocation5], 64
    %v129 = vld [vmem:[%s128] sm:$0xff]
    %v130 = vld [vmem:[%s128 + $0x8] sm:$0xff]
    %v131 = vld [vmem:[%s128 + $0x10] sm:$0xff]
    %v132 = vld [vmem:[%s128 + $0x18] sm:$0xff]
    %v133 = vld [vmem:[%s128 + $0x20] sm:$0xff]
    %v134 = vld [vmem:[%s128 + $0x28] sm:$0xff]
    %v135 = vld [vmem:[%s128 + $0x30] sm:$0xff]
    %v136 = vld [vmem:[%s128 + $0x38] sm:$0xff]
    %vm137 = vcmask 523264
    %v138 = vsel %vm137, %v120, 0
    %v140 = vsel %vm137, %v122, 0
    %v142 = vsel %vm137, %v125, 0
    %v144 = vsel %vm137, %v127, 0
    %146 = vmatprep.subr.mxu0 0.0
    %147 = vmatpush1.msra.mxu0 %v129
    %148 = vmatprep.subr.mxu0 0.0
    %149 = vmatpush1.msra.mxu0 %v130
    %150 = vmatprep.subr.mxu0 0.0
    %151 = vmatpush1.msra.mxu0 %v131
    %152 = vmatprep.subr.mxu0 0.0
    %153 = vmatpush1.msra.mxu0 %v132
    %154 = vmatprep.subr.mxu0 0.0
    %155 = vmatpush1.msra.mxu0 %v133
    %156 = vmatprep.subr.mxu0 0.0
    %157 = vmatpush1.msra.mxu0 %v134
    %158 = vmatprep.subr.mxu0 0.0
    %159 = vmatpush1.msra.mxu0 %v135
    %160 = vmatprep.subr.mxu0 0.0
    %161 = vmatpush1.msra.mxu0 %v136
    %162 = vmatprep.subr.mxu0 0.0
    %163 = vmatpush1.msra.mxu0 0.0
    %164 = vmatprep.subr.mxu0 0.0
    %165 = vmatpush1.msra.mxu0 0.0
    %166 = vmatprep.subr.mxu0 0.0
    %167 = vmatpush1.msra.mxu0 0.0
    %168 = vmatprep.subr.mxu0 0.0
    %169 = vmatpush1.msra.mxu0 0.0
    %170 = vmatprep.subr.mxu0 0.0
    %171 = vmatpush1.msra.mxu0 0.0
    %172 = vmatprep.subr.mxu0 0.0
    %173 = vmatpush1.msra.mxu0 0.0
    %174 = vmatprep.subr.mxu0 0.0
    %175 = vmatpush1.msra.mxu0 0.0
    %176 = vmatprep.subr.mxu0 0.0
    %177 = vmatpush1.msra.mxu0 0.0
    %178 = vmatprep.subr.mxu0 0.0
    %179 = vmatpush1.msra.mxu0 0.0
    %180 = vmatprep.subr.mxu0 0.0
    %181 = vmatpush1.msra.mxu0 0.0
    %182 = vmatprep.subr.mxu0 0.0
    %183 = vmatpush1.msra.mxu0 0.0
    %184 = vmatprep.subr.mxu0 0.0
    %185 = vmatpush1.msra.mxu0 0.0
    %186 = vmatprep.subr.mxu0 0.0
    %187 = vmatpush1.msra.mxu0 0.0
    %188 = vmatprep.subr.mxu0 0.0
    %189 = vmatpush1.msra.mxu0 0.0
    %190 = vmatprep.subr.mxu0 0.0
    %191 = vmatpush1.msra.mxu0 0.0
    %192 = vmatprep.subr.mxu0 0.0
    %193 = vmatpush1.msra.mxu0 0.0
    %194 = vmatprep.subr.mxu0 0.0
    %195 = vmatpush1.msra.mxu0 0.0
    %196 = vmatprep.subr.mxu0 0.0
    %197 = vmatpush1.msra.mxu0 0.0
    %198 = vmatprep.subr.mxu0 0.0
    %199 = vmatpush1.msra.mxu0 0.0
    %200 = vmatprep.subr.mxu0 0.0
    %201 = vmatpush1.msra.mxu0 0.0
    %202 = vmatprep.subr.mxu0 0.0
    %203 = vmatpush1.msra.mxu0 0.0
    %204 = vmatprep.subr.mxu0 0.0
    %205 = vmatpush1.msra.mxu0 0.0
    %206 = vmatprep.subr.mxu0 0.0
    %207 = vmatpush1.msra.mxu0 0.0
    %208 = vmatprep.subr.mxu0 0.0
    %209 = vmatpush1.msra.mxu0 0.0
    %210 = vmatprep.mubr.f32.mxu0 0.0
    %211 = vmatmul.mubr.f32.gmra.mrb[0].mxu0 %v138
    %v212 = vpop.f32.mrb[0].mxu0
    %v213 = vadd.f32 0.0, %v212
    %v214 = vpop.f32.mrb[0].mxu0
    %215 = vmatprep.mubr.f32.mxu0 0.0
    %216 = vmatmul.mubr.f32.gmra.mrb[0].mxu0 %v140
    %v217 = vpop.f32.mrb[0].mxu0
    %v218 = vadd.f32 0.0, %v217
    %v219 = vpop.f32.mrb[0].mxu0
    %220 = vmatprep.mubr.f32.mxu0 0.0
    %221 = vmatmul.mubr.f32.gmra.mrb[0].mxu0 %v142
    %v222 = vpop.f32.mrb[0].mxu0
    %v223 = vadd.f32 0.0, %v222
    %v224 = vpop.f32.mrb[0].mxu0
    %225 = vmatprep.mubr.f32.mxu0 0.0
    %226 = vmatmul.mubr.f32.gmra.mrb[0].mxu0 %v144
    %v227 = vpop.f32.mrb[0].mxu0
    %v228 = vadd.f32 0.0, %v227
    %v229 = vpop.f32.mrb[0].mxu0
    %230 = vdwg.mxu0
    %v231 = vsel %vm137, %v101, 0
    %v233 = vsel %vm137, %v93, 0
    %v235 = vsel %vm137, %v102, 0
    %v237 = vsel %vm137, %v96, 0
    %239 = vmatprep.subr.mxu0 0.0
    %240 = vmatpush1.msra.mxu0 %v105
    %241 = vmatprep.subr.mxu0 0.0
    %242 = vmatpush1.msra.mxu0 %v106
    %243 = vmatprep.subr.mxu0 0.0
    %244 = vmatpush1.msra.mxu0 %v107
    %245 = vmatprep.subr.mxu0 0.0
    %246 = vmatpush1.msra.mxu0 %v108
    %247 = vmatprep.subr.mxu0 0.0
    %248 = vmatpush1.msra.mxu0 %v109
    %249 = vmatprep.subr.mxu0 0.0
    %250 = vmatpush1.msra.mxu0 %v110
    %251 = vmatprep.subr.mxu0 0.0
    %252 = vmatpush1.msra.mxu0 %v111
    %253 = vmatprep.subr.mxu0 0.0
    %254 = vmatpush1.msra.mxu0 %v112
    %255 = vmatprep.subr.mxu0 0.0
    %256 = vmatpush1.msra.mxu0 0.0
    %257 = vmatprep.subr.mxu0 0.0
    %258 = vmatpush1.msra.mxu0 0.0
    %259 = vmatprep.subr.mxu0 0.0
    %260 = vmatpush1.msra.mxu0 0.0
    %261 = vmatprep.subr.mxu0 0.0
    %262 = vmatpush1.msra.mxu0 0.0
    %263 = vmatprep.subr.mxu0 0.0
    %264 = vmatpush1.msra.mxu0 0.0
    %265 = vmatprep.subr.mxu0 0.0
    %266 = vmatpush1.msra.mxu0 0.0
    %267 = vmatprep.subr.mxu0 0.0
    %268 = vmatpush1.msra.mxu0 0.0
    %269 = vmatprep.subr.mxu0 0.0
    %270 = vmatpush1.msra.mxu0 0.0
    %271 = vmatprep.subr.mxu0 0.0
    %272 = vmatpush1.msra.mxu0 0.0
    %273 = vmatprep.subr.mxu0 0.0
    %274 = vmatpush1.msra.mxu0 0.0
    %275 = vmatprep.subr.mxu0 0.0
    %276 = vmatpush1.msra.mxu0 0.0
    %277 = vmatprep.subr.mxu0 0.0
    %278 = vmatpush1.msra.mxu0 0.0
    %279 = vmatprep.subr.mxu0 0.0
    %280 = vmatpush1.msra.mxu0 0.0
    %281 = vmatprep.subr.mxu0 0.0
    %282 = vmatpush1.msra.mxu0 0.0
    %283 = vmatprep.subr.mxu0 0.0
    %284 = vmatpush1.msra.mxu0 0.0
    %285 = vmatprep.subr.mxu0 0.0
    %286 = vmatpush1.msra.mxu0 0.0
    %287 = vmatprep.subr.mxu0 0.0
    %288 = vmatpush1.msra.mxu0 0.0
    %289 = vmatprep.subr.mxu0 0.0
    %290 = vmatpush1.msra.mxu0 0.0
    %291 = vmatprep.subr.mxu0 0.0
    %292 = vmatpush1.msra.mxu0 0.0
    %293 = vmatprep.subr.mxu0 0.0
    %294 = vmatpush1.msra.mxu0 0.0
    %295 = vmatprep.subr.mxu0 0.0
    %296 = vmatpush1.msra.mxu0 0.0
    %297 = vmatprep.subr.mxu0 0.0
    %298 = vmatpush1.msra.mxu0 0.0
    %299 = vmatprep.subr.mxu0 0.0
    %300 = vmatpush1.msra.mxu0 0.0
    %301 = vmatprep.subr.mxu0 0.0
    %302 = vmatpush1.msra.mxu0 0.0
    %303 = vmatprep.mubr.f32.mxu0 0.0
    %304 = vmatmul.mubr.f32.gmra.mrb[0].mxu0 %v231
    %v305 = vpop.f32.mrb[0].mxu0
    %v306 = vadd.f32 %v213, %v305
    %v307 = vpop.f32.mrb[0].mxu0
    %308 = vmatprep.mubr.f32.mxu0 0.0
    %309 = vmatmul.mubr.f32.gmra.mrb[0].mxu0 %v233
    %v310 = vpop.f32.mrb[0].mxu0
    %v311 = vadd.f32 %v218, %v310
    %v312 = vpop.f32.mrb[0].mxu0
    %313 = vmatprep.mubr.f32.mxu0 0.0
    %314 = vmatmul.mubr.f32.gmra.mrb[0].mxu0 %v235
    %v315 = vpop.f32.mrb[0].mxu0
    %v316 = vadd.f32 %v223, %v315
    %v317 = vpop.f32.mrb[0].mxu0
    %318 = vmatprep.mubr.f32.mxu0 0.0
    %319 = vmatmul.mubr.f32.gmra.mrb[0].mxu0 %v237
    %v320 = vpop.f32.mrb[0].mxu0
    %v321 = vadd.f32 %v228, %v320
    %v322 = vpop.f32.mrb[0].mxu0
    %323 = vdwg.mxu0
    %vm324 = vcmask 1045504
    %v325 = vrot.slane %v101, 2
    %v326 = vrot.slane %v93, 2
    %v327 = vsel %vm324, %v325, %v326
    %v328 = vrot.slane %v103, 2
    %v329 = vsel %vm324, %v326, %v328
    %v330 = vrot.slane %v102, 2
    %v331 = vrot.slane %v96, 2
    %v332 = vsel %vm324, %v330, %v331
    %v333 = vrot.slane %v104, 2
    %v334 = vsel %vm324, %v331, %v333
    %s335 = scalar_lea.vmem [#allocation5], 128
    %v336 = vld [vmem:[%s335] sm:$0xff]
    %v337 = vld [vmem:[%s335 + $0x8] sm:$0xff]
    %v338 = vld [vmem:[%s335 + $0x10] sm:$0xff]
    %v339 = vld [vmem:[%s335 + $0x18] sm:$0xff]
    %v340 = vld [vmem:[%s335 + $0x20] sm:$0xff]
    %v341 = vld [vmem:[%s335 + $0x28] sm:$0xff]
    %v342 = vld [vmem:[%s335 + $0x30] sm:$0xff]
    %v343 = vld [vmem:[%s335 + $0x38] sm:$0xff]
    %v344 = vsel %vm137, %v327, 0
    %v346 = vsel %vm137, %v329, 0
    %v348 = vsel %vm137, %v332, 0
    %v350 = vsel %vm137, %v334, 0
    %352 = vmatprep.subr.mxu0 0.0
    %353 = vmatpush1.msra.mxu0 %v336
    %354 = vmatprep.subr.mxu0 0.0
    %355 = vmatpush1.msra.mxu0 %v337
    %356 = vmatprep.subr.mxu0 0.0
    %357 = vmatpush1.msra.mxu0 %v338
    %358 = vmatprep.subr.mxu0 0.0
    %359 = vmatpush1.msra.mxu0 %v339
    %360 = vmatprep.subr.mxu0 0.0
    %361 = vmatpush1.msra.mxu0 %v340
    %362 = vmatprep.subr.mxu0 0.0
    %363 = vmatpush1.msra.mxu0 %v341
    %364 = vmatprep.subr.mxu0 0.0
    %365 = vmatpush1.msra.mxu0 %v342
    %366 = vmatprep.subr.mxu0 0.0
    %367 = vmatpush1.msra.mxu0 %v343
    %368 = vmatprep.subr.mxu0 0.0
    %369 = vmatpush1.msra.mxu0 0.0
    %370 = vmatprep.subr.mxu0 0.0
    %371 = vmatpush1.msra.mxu0 0.0
    %372 = vmatprep.subr.mxu0 0.0
    %373 = vmatpush1.msra.mxu0 0.0
    %374 = vmatprep.subr.mxu0 0.0
    %375 = vmatpush1.msra.mxu0 0.0
    %376 = vmatprep.subr.mxu0 0.0
    %377 = vmatpush1.msra.mxu0 0.0
    %378 = vmatprep.subr.mxu0 0.0
    %379 = vmatpush1.msra.mxu0 0.0
    %380 = vmatprep.subr.mxu0 0.0
    %381 = vmatpush1.msra.mxu0 0.0
    %382 = vmatprep.subr.mxu0 0.0
    %383 = vmatpush1.msra.mxu0 0.0
    %384 = vmatprep.subr.mxu0 0.0
    %385 = vmatpush1.msra.mxu0 0.0
    %386 = vmatprep.subr.mxu0 0.0
    %387 = vmatpush1.msra.mxu0 0.0
    %388 = vmatprep.subr.mxu0 0.0
    %389 = vmatpush1.msra.mxu0 0.0
    %390 = vmatprep.subr.mxu0 0.0
    %391 = vmatpush1.msra.mxu0 0.0
    %392 = vmatprep.subr.mxu0 0.0
    %393 = vmatpush1.msra.mxu0 0.0
    %394 = vmatprep.subr.mxu0 0.0
    %395 = vmatpush1.msra.mxu0 0.0
    %396 = vmatprep.subr.mxu0 0.0
    %397 = vmatpush1.msra.mxu0 0.0
    %398 = vmatprep.subr.mxu0 0.0
    %399 = vmatpush1.msra.mxu0 0.0
    %400 = vmatprep.subr.mxu0 0.0
    %401 = vmatpush1.msra.mxu0 0.0
    %402 = vmatprep.subr.mxu0 0.0
    %403 = vmatpush1.msra.mxu0 0.0
    %404 = vmatprep.subr.mxu0 0.0
    %405 = vmatpush1.msra.mxu0 0.0
    %406 = vmatprep.subr.mxu0 0.0
    %407 = vmatpush1.msra.mxu0 0.0
    %408 = vmatprep.subr.mxu0 0.0
    %409 = vmatpush1.msra.mxu0 0.0
    %410 = vmatprep.subr.mxu0 0.0
    %411 = vmatpush1.msra.mxu0 0.0
    %412 = vmatprep.subr.mxu0 0.0
    %413 = vmatpush1.msra.mxu0 0.0
    %414 = vmatprep.subr.mxu0 0.0
    %415 = vmatpush1.msra.mxu0 0.0
    %416 = vmatprep.mubr.f32.mxu0 0.0
    %417 = vmatmul.mubr.f32.gmra.mrb[0].mxu0 %v344
    %v418 = vpop.f32.mrb[0].mxu0
    %v419 = vadd.f32 0.0, %v418
    %v420 = vpop.f32.mrb[0].mxu0
    %421 = vmatprep.mubr.f32.mxu0 0.0
    %422 = vmatmul.mubr.f32.gmra.mrb[0].mxu0 %v346
    %v423 = vpop.f32.mrb[0].mxu0
    %v424 = vadd.f32 0.0, %v423
    %v425 = vpop.f32.mrb[0].mxu0
    %426 = vmatprep.mubr.f32.mxu0 0.0
    %427 = vmatmul.mubr.f32.gmra.mrb[0].mxu0 %v348
    %v428 = vpop.f32.mrb[0].mxu0
    %v429 = vadd.f32 0.0, %v428
    %v430 = vpop.f32.mrb[0].mxu0
    %431 = vmatprep.mubr.f32.mxu0 0.0
    %432 = vmatmul.mubr.f32.gmra.mrb[0].mxu0 %v350
    %v433 = vpop.f32.mrb[0].mxu0
    %v434 = vadd.f32 0.0, %v433
    %v435 = vpop.f32.mrb[0].mxu0
    %436 = vdwg.mxu0
    %v437 = vadd.f32 %v306, %v419
    %v438 = vadd.f32 %v311, %v424
    %v439 = vadd.f32 %v316, %v429
    %v440 = vadd.f32 %v321, %v434
    %v441 = vld [vmem:[%s2] sm:$0x1]
    %v443 = vlaneseq
    %v444 = vshrl.u32 %v443, 7
    %v445 = vsub.s32 0, %v444
    %v446 = vrot.slane %v441, %v445
    %v448 = vadd.f32 %v437, %v446
    %v449 = vadd.f32 %v438, %v446
    %v450 = vadd.f32 %v439, %v446
    %v451 = vadd.f32 %v440, %v446
    %v452 = vmax.f32 %v448, 0.0
    %v453 = vmax.f32 %v449, 0.0
    %v454 = vmax.f32 %v450, 0.0
    %v455 = vmax.f32 %v451, 0.0
    %v460 = vrot.slane %v452, 7
    %v461 = vrot.slane %v453, 7
    %v462 = vsel %vm90, %v460, %v461
    %v463 = vrot.slane %v454, 7
    %v464 = vrot.slane %v455, 7
    %v465 = vsel %vm90, %v463, %v464
    %v472 = vsel %vm90, 0.0, %v460
    %v473 = vsel %vm90, 0.0, %v463
    %v474 = vsel %vm90, %v461, 0.0
    %v475 = vsel %vm90, %v464, 0.0
    %v476 = vld [vmem:[#allocation7] sm:$0xff]
    %v477 = vld [vmem:[#allocation7 + $0x8] sm:$0xff]
    %v478 = vld [vmem:[#allocation7 + $0x10] sm:$0xff]
    %v479 = vld [vmem:[#allocation7 + $0x18] sm:$0xff]
    %v480 = vld [vmem:[#allocation7 + $0x20] sm:$0xff]
    %v481 = vld [vmem:[#allocation7 + $0x28] sm:$0xff]
    %v482 = vld [vmem:[#allocation7 + $0x30] sm:$0xff]
    %v483 = vld [vmem:[#allocation7 + $0x38] sm:$0xff]
    %v484 = vld [vmem:[#allocation7 + $0x40] sm:$0xff]
    %v485 = vld [vmem:[#allocation7 + $0x48] sm:$0xff]
    %v486 = vld [vmem:[#allocation7 + $0x50] sm:$0xff]
    %v487 = vld [vmem:[#allocation7 + $0x58] sm:$0xff]
    %v488 = vld [vmem:[#allocation7 + $0x60] sm:$0xff]
    %v489 = vld [vmem:[#allocation7 + $0x68] sm:$0xff]
    %v490 = vld [vmem:[#allocation7 + $0x70] sm:$0xff]
    %v491 = vld [vmem:[#allocation7 + $0x78] sm:$0xff]
    %v496 = vrot.slane %v472, 1
    %v497 = vrot.slane %v462, 1
    %v498 = vsel %vm117, %v496, %v497
    %v499 = vrot.slane %v474, 1
    %v500 = vsel %vm117, %v497, %v499
    %v501 = vrot.slane %v473, 1
    %v502 = vrot.slane %v465, 1
    %v503 = vsel %vm117, %v501, %v502
    %v504 = vrot.slane %v475, 1
    %v505 = vsel %vm117, %v502, %v504
    %s510 = scalar_lea.vmem [#allocation7], 128
    %v511 = vld [vmem:[%s510] sm:$0xff]
    %v512 = vld [vmem:[%s510 + $0x8] sm:$0xff]
    %v513 = vld [vmem:[%s510 + $0x10] sm:$0xff]
    %v514 = vld [vmem:[%s510 + $0x18] sm:$0xff]
    %v515 = vld [vmem:[%s510 + $0x20] sm:$0xff]
    %v516 = vld [vmem:[%s510 + $0x28] sm:$0xff]
    %v517 = vld [vmem:[%s510 + $0x30] sm:$0xff]
    %v518 = vld [vmem:[%s510 + $0x38] sm:$0xff]
    %v519 = vld [vmem:[%s510 + $0x40] sm:$0xff]
    %v520 = vld [vmem:[%s510 + $0x48] sm:$0xff]
    %v521 = vld [vmem:[%s510 + $0x50] sm:$0xff]
    %v522 = vld [vmem:[%s510 + $0x58] sm:$0xff]
    %v523 = vld [vmem:[%s510 + $0x60] sm:$0xff]
    %v524 = vld [vmem:[%s510 + $0x68] sm:$0xff]
    %v525 = vld [vmem:[%s510 + $0x70] sm:$0xff]
    %v526 = vld [vmem:[%s510 + $0x78] sm:$0xff]
    %527 = vmatprep.subr.mxu0 0.0
    %528 = vmatpush1.msra.mxu0 %v511
    %529 = vmatprep.subr.mxu0 0.0
    %530 = vmatpush1.msra.mxu0 %v512
    %531 = vmatprep.subr.mxu0 0.0
    %532 = vmatpush1.msra.mxu0 %v513
    %533 = vmatprep.subr.mxu0 0.0
    %534 = vmatpush1.msra.mxu0 %v514
    %535 = vmatprep.subr.mxu0 0.0
    %536 = vmatpush1.msra.mxu0 %v515
    %537 = vmatprep.subr.mxu0 0.0
    %538 = vmatpush1.msra.mxu0 %v516
    %539 = vmatprep.subr.mxu0 0.0
    %540 = vmatpush1.msra.mxu0 %v517
    %541 = vmatprep.subr.mxu0 0.0
    %542 = vmatpush1.msra.mxu0 %v518
    %543 = vmatprep.subr.mxu0 0.0
    %544 = vmatpush1.msra.mxu0 %v519
    %545 = vmatprep.subr.mxu0 0.0
    %546 = vmatpush1.msra.mxu0 %v520
    %547 = vmatprep.subr.mxu0 0.0
    %548 = vmatpush1.msra.mxu0 %v521
    %549 = vmatprep.subr.mxu0 0.0
    %550 = vmatpush1.msra.mxu0 %v522
    %551 = vmatprep.subr.mxu0 0.0
    %552 = vmatpush1.msra.mxu0 %v523
    %553 = vmatprep.subr.mxu0 0.0
    %554 = vmatpush1.msra.mxu0 %v524
    %555 = vmatprep.subr.mxu0 0.0
    %556 = vmatpush1.msra.mxu0 %v525
    %557 = vmatprep.subr.mxu0 0.0
    %558 = vmatpush1.msra.mxu0 %v526
    %559 = vmatprep.subr.mxu0 0.0
    %560 = vmatpush1.msra.mxu0 0.0
    %561 = vmatprep.subr.mxu0 0.0
    %562 = vmatpush1.msra.mxu0 0.0
    %563 = vmatprep.subr.mxu0 0.0
    %564 = vmatpush1.msra.mxu0 0.0
    %565 = vmatprep.subr.mxu0 0.0
    %566 = vmatpush1.msra.mxu0 0.0
    %567 = vmatprep.subr.mxu0 0.0
    %568 = vmatpush1.msra.mxu0 0.0
    %569 = vmatprep.subr.mxu0 0.0
    %570 = vmatpush1.msra.mxu0 0.0
    %571 = vmatprep.subr.mxu0 0.0
    %572 = vmatpush1.msra.mxu0 0.0
    %573 = vmatprep.subr.mxu0 0.0
    %574 = vmatpush1.msra.mxu0 0.0
    %575 = vmatprep.subr.mxu0 0.0
    %576 = vmatpush1.msra.mxu0 0.0
    %577 = vmatprep.subr.mxu0 0.0
    %578 = vmatpush1.msra.mxu0 0.0
    %579 = vmatprep.subr.mxu0 0.0
    %580 = vmatpush1.msra.mxu0 0.0
    %581 = vmatprep.subr.mxu0 0.0
    %582 = vmatpush1.msra.mxu0 0.0
    %583 = vmatprep.subr.mxu0 0.0
    %584 = vmatpush1.msra.mxu0 0.0
    %585 = vmatprep.subr.mxu0 0.0
    %586 = vmatpush1.msra.mxu0 0.0
    %587 = vmatprep.subr.mxu0 0.0
    %588 = vmatpush1.msra.mxu0 0.0
    %589 = vmatprep.subr.mxu0 0.0
    %590 = vmatpush1.msra.mxu0 0.0
    %591 = vmatprep.mubr.f32.mxu0 0.0
    %592 = vmatmul.mubr.f32.gmra.mrb[0].mxu0 %v498
    %v593 = vpop.f32.mrb[0].mxu0
    %v594 = vadd.f32 0.0, %v593
    %v595 = vpop.f32.mrb[0].mxu0
    %596 = vmatprep.mubr.f32.mxu0 0.0
    %597 = vmatmul.mubr.f32.gmra.mrb[0].mxu0 %v500
    %v598 = vpop.f32.mrb[0].mxu0
    %v599 = vadd.f32 0.0, %v598
    %v600 = vpop.f32.mrb[0].mxu0
    %601 = vmatprep.mubr.f32.mxu0 0.0
    %602 = vmatmul.mubr.f32.gmra.mrb[0].mxu0 %v503
    %v603 = vpop.f32.mrb[0].mxu0
    %v604 = vadd.f32 0.0, %v603
    %v605 = vpop.f32.mrb[0].mxu0
    %606 = vmatprep.mubr.f32.mxu0 0.0
    %607 = vmatmul.mubr.f32.gmra.mrb[0].mxu0 %v505
    %v608 = vpop.f32.mrb[0].mxu0
    %v609 = vadd.f32 0.0, %v608
    %v610 = vpop.f32.mrb[0].mxu0
    %611 = vdwg.mxu0
    %612 = vmatprep.subr.mxu0 0.0
    %613 = vmatpush1.msra.mxu0 %v476
    %614 = vmatprep.subr.mxu0 0.0
    %615 = vmatpush1.msra.mxu0 %v477
    %616 = vmatprep.subr.mxu0 0.0
    %617 = vmatpush1.msra.mxu0 %v478
    %618 = vmatprep.subr.mxu0 0.0
    %619 = vmatpush1.msra.mxu0 %v479
    %620 = vmatprep.subr.mxu0 0.0
    %621 = vmatpush1.msra.mxu0 %v480
    %622 = vmatprep.subr.mxu0 0.0
    %623 = vmatpush1.msra.mxu0 %v481
    %624 = vmatprep.subr.mxu0 0.0
    %625 = vmatpush1.msra.mxu0 %v482
    %626 = vmatprep.subr.mxu0 0.0
    %627 = vmatpush1.msra.mxu0 %v483
    %628 = vmatprep.subr.mxu0 0.0
    %629 = vmatpush1.msra.mxu0 %v484
    %630 = vmatprep.subr.mxu0 0.0
    %631 = vmatpush1.msra.mxu0 %v485
    %632 = vmatprep.subr.mxu0 0.0
    %633 = vmatpush1.msra.mxu0 %v486
    %634 = vmatprep.subr.mxu0 0.0
    %635 = vmatpush1.msra.mxu0 %v487
    %636 = vmatprep.subr.mxu0 0.0
    %637 = vmatpush1.msra.mxu0 %v488
    %638 = vmatprep.subr.mxu0 0.0
    %639 = vmatpush1.msra.mxu0 %v489
    %640 = vmatprep.subr.mxu0 0.0
    %641 = vmatpush1.msra.mxu0 %v490
    %642 = vmatprep.subr.mxu0 0.0
    %643 = vmatpush1.msra.mxu0 %v491
    %644 = vmatprep.subr.mxu0 0.0
    %645 = vmatpush1.msra.mxu0 0.0
    %646 = vmatprep.subr.mxu0 0.0
    %647 = vmatpush1.msra.mxu0 0.0
    %648 = vmatprep.subr.mxu0 0.0
    %649 = vmatpush1.msra.mxu0 0.0
    %650 = vmatprep.subr.mxu0 0.0
    %651 = vmatpush1.msra.mxu0 0.0
    %652 = vmatprep.subr.mxu0 0.0
    %653 = vmatpush1.msra.mxu0 0.0
    %654 = vmatprep.subr.mxu0 0.0
    %655 = vmatpush1.msra.mxu0 0.0
    %656 = vmatprep.subr.mxu0 0.0
    %657 = vmatpush1.msra.mxu0 0.0
    %658 = vmatprep.subr.mxu0 0.0
    %659 = vmatpush1.msra.mxu0 0.0
    %660 = vmatprep.subr.mxu0 0.0
    %661 = vmatpush1.msra.mxu0 0.0
    %662 = vmatprep.subr.mxu0 0.0
    %663 = vmatpush1.msra.mxu0 0.0
    %664 = vmatprep.subr.mxu0 0.0
    %665 = vmatpush1.msra.mxu0 0.0
    %666 = vmatprep.subr.mxu0 0.0
    %667 = vmatpush1.msra.mxu0 0.0
    %668 = vmatprep.subr.mxu0 0.0
    %669 = vmatpush1.msra.mxu0 0.0
    %670 = vmatprep.subr.mxu0 0.0
    %671 = vmatpush1.msra.mxu0 0.0
    %672 = vmatprep.subr.mxu0 0.0
    %673 = vmatpush1.msra.mxu0 0.0
    %674 = vmatprep.subr.mxu0 0.0
    %675 = vmatpush1.msra.mxu0 0.0
    %676 = vmatprep.mubr.f32.mxu0 0.0
    %677 = vmatmul.mubr.f32.gmra.mrb[0].mxu0 %v472
    %v678 = vpop.f32.mrb[0].mxu0
    %v679 = vadd.f32 %v594, %v678
    %v680 = vpop.f32.mrb[0].mxu0
    %681 = vmatprep.mubr.f32.mxu0 0.0
    %682 = vmatmul.mubr.f32.gmra.mrb[0].mxu0 %v462
    %v683 = vpop.f32.mrb[0].mxu0
    %v684 = vadd.f32 %v599, %v683
    %v685 = vpop.f32.mrb[0].mxu0
    %686 = vmatprep.mubr.f32.mxu0 0.0
    %687 = vmatmul.mubr.f32.gmra.mrb[0].mxu0 %v473
    %v688 = vpop.f32.mrb[0].mxu0
    %v689 = vadd.f32 %v604, %v688
    %v690 = vpop.f32.mrb[0].mxu0
    %691 = vmatprep.mubr.f32.mxu0 0.0
    %692 = vmatmul.mubr.f32.gmra.mrb[0].mxu0 %v465
    %v693 = vpop.f32.mrb[0].mxu0
    %v694 = vadd.f32 %v609, %v693
    %v695 = vpop.f32.mrb[0].mxu0
    %696 = vdwg.mxu0
    %v697 = vrot.slane %v472, 2
    %v698 = vrot.slane %v462, 2
    %v699 = vsel %vm324, %v697, %v698
    %v700 = vrot.slane %v474, 2
    %v701 = vsel %vm324, %v698, %v700
    %v702 = vrot.slane %v473, 2
    %v703 = vrot.slane %v465, 2
    %v704 = vsel %vm324, %v702, %v703
    %v705 = vrot.slane %v475, 2
    %v706 = vsel %vm324, %v703, %v705
    %s711 = scalar_lea.vmem [#allocation7], 256
    %v712 = vld [vmem:[%s711] sm:$0xff]
    %v713 = vld [vmem:[%s711 + $0x8] sm:$0xff]
    %v714 = vld [vmem:[%s711 + $0x10] sm:$0xff]
    %v715 = vld [vmem:[%s711 + $0x18] sm:$0xff]
    %v716 = vld [vmem:[%s711 + $0x20] sm:$0xff]
    %v717 = vld [vmem:[%s711 + $0x28] sm:$0xff]
    %v718 = vld [vmem:[%s711 + $0x30] sm:$0xff]
    %v719 = vld [vmem:[%s711 + $0x38] sm:$0xff]
    %v720 = vld [vmem:[%s711 + $0x40] sm:$0xff]
    %v721 = vld [vmem:[%s711 + $0x48] sm:$0xff]
    %v722 = vld [vmem:[%s711 + $0x50] sm:$0xff]
    %v723 = vld [vmem:[%s711 + $0x58] sm:$0xff]
    %v724 = vld [vmem:[%s711 + $0x60] sm:$0xff]
    %v725 = vld [vmem:[%s711 + $0x68] sm:$0xff]
    %v726 = vld [vmem:[%s711 + $0x70] sm:$0xff]
    %v727 = vld [vmem:[%s711 + $0x78] sm:$0xff]
    %728 = vmatprep.subr.mxu0 0.0
    %729 = vmatpush1.msra.mxu0 %v712
    %730 = vmatprep.subr.mxu0 0.0
    %731 = vmatpush1.msra.mxu0 %v713
    %732 = vmatprep.subr.mxu0 0.0
    %733 = vmatpush1.msra.mxu0 %v714
    %734 = vmatprep.subr.mxu0 0.0
    %735 = vmatpush1.msra.mxu0 %v715
    %736 = vmatprep.subr.mxu0 0.0
    %737 = vmatpush1.msra.mxu0 %v716
    %738 = vmatprep.subr.mxu0 0.0
    %739 = vmatpush1.msra.mxu0 %v717
    %740 = vmatprep.subr.mxu0 0.0
    %741 = vmatpush1.msra.mxu0 %v718
    %742 = vmatprep.subr.mxu0 0.0
    %743 = vmatpush1.msra.mxu0 %v719
    %744 = vmatprep.subr.mxu0 0.0
    %745 = vmatpush1.msra.mxu0 %v720
    %746 = vmatprep.subr.mxu0 0.0
    %747 = vmatpush1.msra.mxu0 %v721
    %748 = vmatprep.subr.mxu0 0.0
    %749 = vmatpush1.msra.mxu0 %v722
    %750 = vmatprep.subr.mxu0 0.0
    %751 = vmatpush1.msra.mxu0 %v723
    %752 = vmatprep.subr.mxu0 0.0
    %753 = vmatpush1.msra.mxu0 %v724
    %754 = vmatprep.subr.mxu0 0.0
    %755 = vmatpush1.msra.mxu0 %v725
    %756 = vmatprep.subr.mxu0 0.0
    %757 = vmatpush1.msra.mxu0 %v726
    %758 = vmatprep.subr.mxu0 0.0
    %759 = vmatpush1.msra.mxu0 %v727
    %760 = vmatprep.subr.mxu0 0.0
    %761 = vmatpush1.msra.mxu0 0.0
    %762 = vmatprep.subr.mxu0 0.0
    %763 = vmatpush1.msra.mxu0 0.0
    %764 = vmatprep.subr.mxu0 0.0
    %765 = vmatpush1.msra.mxu0 0.0
    %766 = vmatprep.subr.mxu0 0.0
    %767 = vmatpush1.msra.mxu0 0.0
    %768 = vmatprep.subr.mxu0 0.0
    %769 = vmatpush1.msra.mxu0 0.0
    %770 = vmatprep.subr.mxu0 0.0
    %771 = vmatpush1.msra.mxu0 0.0
    %772 = vmatprep.subr.mxu0 0.0
    %773 = vmatpush1.msra.mxu0 0.0
    %774 = vmatprep.subr.mxu0 0.0
    %775 = vmatpush1.msra.mxu0 0.0
    %776 = vmatprep.subr.mxu0 0.0
    %777 = vmatpush1.msra.mxu0 0.0
    %778 = vmatprep.subr.mxu0 0.0
    %779 = vmatpush1.msra.mxu0 0.0
    %780 = vmatprep.subr.mxu0 0.0
    %781 = vmatpush1.msra.mxu0 0.0
    %782 = vmatprep.subr.mxu0 0.0
    %783 = vmatpush1.msra.mxu0 0.0
    %784 = vmatprep.subr.mxu0 0.0
    %785 = vmatpush1.msra.mxu0 0.0
    %786 = vmatprep.subr.mxu0 0.0
    %787 = vmatpush1.msra.mxu0 0.0
    %788 = vmatprep.subr.mxu0 0.0
    %789 = vmatpush1.msra.mxu0 0.0
    %790 = vmatprep.subr.mxu0 0.0
    %791 = vmatpush1.msra.mxu0 0.0
    %792 = vmatprep.mubr.f32.mxu0 0.0
    %793 = vmatmul.mubr.f32.gmra.mrb[0].mxu0 %v699
    %v794 = vpop.f32.mrb[0].mxu0
    %v795 = vadd.f32 0.0, %v794
    %v796 = vpop.f32.mrb[0].mxu0
    %797 = vmatprep.mubr.f32.mxu0 0.0
    %798 = vmatmul.mubr.f32.gmra.mrb[0].mxu0 %v701
    %v799 = vpop.f32.mrb[0].mxu0
    %v800 = vadd.f32 0.0, %v799
    %v801 = vpop.f32.mrb[0].mxu0
    %802 = vmatprep.mubr.f32.mxu0 0.0
    %803 = vmatmul.mubr.f32.gmra.mrb[0].mxu0 %v704
    %v804 = vpop.f32.mrb[0].mxu0
    %v805 = vadd.f32 0.0, %v804
    %v806 = vpop.f32.mrb[0].mxu0
    %807 = vmatprep.mubr.f32.mxu0 0.0
    %808 = vmatmul.mubr.f32.gmra.mrb[0].mxu0 %v706
    %v809 = vpop.f32.mrb[0].mxu0
    %v810 = vadd.f32 0.0, %v809
    %v811 = vpop.f32.mrb[0].mxu0
    %812 = vdwg.mxu0
    %v813 = vadd.f32 %v679, %v795
    %v814 = vadd.f32 %v684, %v800
    %v815 = vadd.f32 %v689, %v805
    %v816 = vadd.f32 %v694, %v810
    %v817 = vld [vmem:[%s4] sm:$0x1]
    %v819 = vlaneseq
    %v820 = vshrl.u32 %v819, 7
    %v821 = vsub.s32 0, %v820
    %v822 = vrot.slane %v817, %v821
    %v824 = vadd.f32 %v813, %v822
    %v825 = vadd.f32 %v814, %v822
    %v826 = vadd.f32 %v815, %v822
    %v827 = vadd.f32 %v816, %v822
    %v828 = vmax.f32 %v824, 0.0
    %v829 = vmax.f32 %v825, 0.0
    %v830 = vmax.f32 %v826, 0.0
    %v831 = vmax.f32 %v827, 0.0
    %v832 = vld [vmem:[#allocation8] sm:$0xff]
    %v833 = vld [vmem:[#allocation8 + $0x8] sm:$0xff]
    %v834 = vld [vmem:[#allocation8 + $0x10] sm:$0xff]
    %v835 = vld [vmem:[#allocation8 + $0x18] sm:$0xff]
    %v836 = vld [vmem:[#allocation8 + $0x20] sm:$0xff]
    %v837 = vld [vmem:[#allocation8 + $0x28] sm:$0xff]
    %v838 = vld [vmem:[#allocation8 + $0x30] sm:$0xff]
    %v839 = vld [vmem:[#allocation8 + $0x38] sm:$0xff]
    %v840 = vsel %vm137, %v82, 0
    %v842 = vsel %vm137, %v83, 0
    %v844 = vsel %vm137, %v84, 0
    %v846 = vsel %vm137, %v85, 0
    %848 = vmatprep.subr.mxu0 0.0
    %849 = vmatpush1.msra.mxu0 %v832
    %850 = vmatprep.subr.mxu0 0.0
    %851 = vmatpush1.msra.mxu0 %v833
    %852 = vmatprep.subr.mxu0 0.0
    %853 = vmatpush1.msra.mxu0 %v834
    %854 = vmatprep.subr.mxu0 0.0
    %855 = vmatpush1.msra.mxu0 %v835
    %856 = vmatprep.subr.mxu0 0.0
    %857 = vmatpush1.msra.mxu0 %v836
    %858 = vmatprep.subr.mxu0 0.0
    %859 = vmatpush1.msra.mxu0 %v837
    %860 = vmatprep.subr.mxu0 0.0
    %861 = vmatpush1.msra.mxu0 %v838
    %862 = vmatprep.subr.mxu0 0.0
    %863 = vmatpush1.msra.mxu0 %v839
    %864 = vmatprep.subr.mxu0 0.0
    %865 = vmatpush1.msra.mxu0 0.0
    %866 = vmatprep.subr.mxu0 0.0
    %867 = vmatpush1.msra.mxu0 0.0
    %868 = vmatprep.subr.mxu0 0.0
    %869 = vmatpush1.msra.mxu0 0.0
    %870 = vmatprep.subr.mxu0 0.0
    %871 = vmatpush1.msra.mxu0 0.0
    %872 = vmatprep.subr.mxu0 0.0
    %873 = vmatpush1.msra.mxu0 0.0
    %874 = vmatprep.subr.mxu0 0.0
    %875 = vmatpush1.msra.mxu0 0.0
    %876 = vmatprep.subr.mxu0 0.0
    %877 = vmatpush1.msra.mxu0 0.0
    %878 = vmatprep.subr.mxu0 0.0
    %879 = vmatpush1.msra.mxu0 0.0
    %880 = vmatprep.subr.mxu0 0.0
    %881 = vmatpush1.msra.mxu0 0.0
    %882 = vmatprep.subr.mxu0 0.0
    %883 = vmatpush1.msra.mxu0 0.0
    %884 = vmatprep.subr.mxu0 0.0
    %885 = vmatpush1.msra.mxu0 0.0
    %886 = vmatprep.subr.mxu0 0.0
    %887 = vmatpush1.msra.mxu0 0.0
    %888 = vmatprep.subr.mxu0 0.0
    %889 = vmatpush1.msra.mxu0 0.0
    %890 = vmatprep.subr.mxu0 0.0
    %891 = vmatpush1.msra.mxu0 0.0
    %892 = vmatprep.subr.mxu0 0.0
    %893 = vmatpush1.msra.mxu0 0.0
    %894 = vmatprep.subr.mxu0 0.0
    %895 = vmatpush1.msra.mxu0 0.0
    %896 = vmatprep.subr.mxu0 0.0
    %897 = vmatpush1.msra.mxu0 0.0
    %898 = vmatprep.subr.mxu0 0.0
    %899 = vmatpush1.msra.mxu0 0.0
    %900 = vmatprep.subr.mxu0 0.0
    %901 = vmatpush1.msra.mxu0 0.0
    %902 = vmatprep.subr.mxu0 0.0
    %903 = vmatpush1.msra.mxu0 0.0
    %904 = vmatprep.subr.mxu0 0.0
    %905 = vmatpush1.msra.mxu0 0.0
    %906 = vmatprep.subr.mxu0 0.0
    %907 = vmatpush1.msra.mxu0 0.0
    %908 = vmatprep.subr.mxu0 0.0
    %909 = vmatpush1.msra.mxu0 0.0
    %910 = vmatprep.subr.mxu0 0.0
    %911 = vmatpush1.msra.mxu0 0.0
    %912 = vmatprep.mubr.f32.mxu0 0.0
    %913 = vmatmul.mubr.f32.gmra.mrb[0].mxu0 %v840
    %v914 = vpop.f32.mrb[0].mxu0
    %v915 = vadd.f32 0.0, %v914
    %v916 = vpop.f32.mrb[0].mxu0
    %917 = vmatprep.mubr.f32.mxu0 0.0
    %918 = vmatmul.mubr.f32.gmra.mrb[0].mxu0 %v842
    %v919 = vpop.f32.mrb[0].mxu0
    %v920 = vadd.f32 0.0, %v919
    %v921 = vpop.f32.mrb[0].mxu0
    %922 = vmatprep.mubr.f32.mxu0 0.0
    %923 = vmatmul.mubr.f32.gmra.mrb[0].mxu0 %v844
    %v924 = vpop.f32.mrb[0].mxu0
    %v925 = vadd.f32 0.0, %v924
    %v926 = vpop.f32.mrb[0].mxu0
    %927 = vmatprep.mubr.f32.mxu0 0.0
    %928 = vmatmul.mubr.f32.gmra.mrb[0].mxu0 %v846
    %v929 = vpop.f32.mrb[0].mxu0
    %v930 = vadd.f32 0.0, %v929
    %v931 = vpop.f32.mrb[0].mxu0
    %932 = vdwg.mxu0
    %v933 = vld [vmem:[%s6] sm:$0x1]
    %v935 = vlaneseq
    %v936 = vshrl.u32 %v935, 7
    %v937 = vsub.s32 0, %v936
    %v938 = vrot.slane %v933, %v937
    %v940 = vadd.f32 %v915, %v938
    %v941 = vadd.f32 %v920, %v938
    %v942 = vadd.f32 %v925, %v938
    %v943 = vadd.f32 %v930, %v938
    %v944 = vadd.f32 %v828, %v940
    %v945 = vadd.f32 %v829, %v941
    %v946 = vadd.f32 %v830, %v942
    %v947 = vadd.f32 %v831, %v943
    %948 = vst [vmem:[#allocation10] sm:$0xff] %v944
    %949 = vst [vmem:[#allocation10 + $0x8] sm:$0xff] %v945
    %950 = vst [vmem:[#allocation10 + $0x10] sm:$0xff] %v946
    %951 = vst [vmem:[#allocation10 + $0x18] sm:$0xff] %v947
    // Predicated region
    $region46: #{tpu_custom_call.1} parent=1 // pred_check
      _
    $region47: #{tpu_custom_call.1} parent=1 // pred_check_branch
      %953 = sbr.rel (0) target = $region49
    $region48: #{tpu_custom_call.1} parent=1 // pred_region
      %s955 = ssub.s32 512, 512
      %956 = vsyncadd [#allocation4], %s955
      %s957 = sshll.u32 [#allocation10], 4
      %s958 = int_to_ptr.vmem [resolvable:$true] %s957
      %963 = dma.vmem_to_hbm [thread:$0]  %s958, 512, %s7, [#allocation4], 128, 128, 8
    $region49: #{tpu_custom_call.1} parent=1 // pred_fallthru
      _
    // Predicated region
    $region50: #{tpu_custom_call.1} parent=1 // pred_check
      _
    $region51: #{tpu_custom_call.1} parent=1 // pred_check_branch
      %965 = sbr.rel (0) target = $region53
    $region52: #{tpu_custom_call.1} parent=1 // pred_region
      %966 = dma.done [#allocation4], 512
    $region53: #{tpu_custom_call.1} parent=1 // pred_fallthru
      _
    %967 = vsyncpa [#allocation3], 1
    %968 = vsyncpa [#allocation6], 1
    %969 = vsyncpa [#allocation9], 1
    %970 = vsyncpa [#allocation4], 1

</llo_original>
